<compile_context>
chip_gen: v6e
topology: v6e:2x2x1
jax: 0.10.0
libtpu: 0.0.40
codegen_flags: <defaults>
</compile_context>

<pallas_src>
import functools

import jax
import jax.numpy as jnp
from jax.experimental import pallas as pl
from jax.experimental.pallas import tpu as pltpu


_VMEM_TILE_BUDGET = 24 * 1024 * 1024   # budget for double-buffered input blocks
_VMEM_LIMIT = 48 * 1024 * 1024         # scoped VMEM limit (fits all of v5e/v6e/v7x)


def _round_up(x: int, m: int) -> int:
    return (x + m - 1) // m * m


def _focal_kernel(logp_ref, tgt_ref, out_ref, *, gamma: float):
    # logp_ref: (T, C) f32/bf16 log-probs | tgt_ref: (T, 1) i32 | out_ref: (T, 1) f32
    logp = logp_ref[...].astype(jnp.float32)          # upcast after (bf16) DMA
    tgt = tgt_ref[...]                                # (T, 1) int32

    # Gather inputs[i, targets[i]] via lane-wise select + lane reduction.
    col = jax.lax.broadcasted_iota(jnp.int32, logp.shape, dimension=1)
    picked = jnp.where(col == tgt, logp, 0.0)         # (T, C)
    indexed = jnp.sum(picked, axis=1, keepdims=True)  # (T, 1)

    probs = jnp.exp(indexed)
    one_minus_p = 1.0 - probs
    if gamma == 1.0:                                  # static Python branch
        factor = one_minus_p
    elif gamma == 2.0:
        factor = one_minus_p * one_minus_p
    else:
        base = jnp.maximum(one_minus_p, 0.0)          # guard pow(neg, frac) -> NaN
        factor = jnp.exp(jnp.float32(gamma) * jnp.log(base))
    out_ref[...] = -factor * indexed


def _choose_row_tile(n: int, c: int, itemsize: int, requested: int) -> int:
    align = 16 if itemsize < 4 else 8                 # bf16 sublane tiling is 16
    cap = _VMEM_TILE_BUDGET // (2 * max(c, 1) * itemsize)
    half = _round_up(pl.cdiv(n, 2), align)            # keep >= 2 grid steps
    tile = min(requested, cap, half)
    tile = (tile // align) * align
    return max(align, tile)


def focal_loss(inputs: jax.Array, targets: jax.Array, gamma: float = 1.0,
               *, row_tile: int = 512) -> jax.Array:
    """inputs: (N, C) log-probs (f32 or bf16), targets: (N,) ints -> (N,) f32."""
    n, c = inputs.shape
    itemsize = jnp.dtype(inputs.dtype).itemsize
    tile = _choose_row_tile(n, c, itemsize, row_tile)
    n_pad = _round_up(n, tile)

    if n_pad != n:                                    # cdiv grid via zero padding
        inputs = jnp.pad(inputs, ((0, n_pad - n), (0, 0)))
        targets = jnp.pad(targets, (0, n_pad - n))
    tgt2d = targets.astype(jnp.int32).reshape(n_pad, 1)

    out = pl.pallas_call(
        functools.partial(_focal_kernel, gamma=float(gamma)),
        out_shape=jax.ShapeDtypeStruct((n_pad, 1), jnp.float32),
        grid_spec=pltpu.PrefetchScalarGridSpec(
            num_scalar_prefetch=0,
            grid=(n_pad // tile,),
            in_specs=[
                pl.BlockSpec((tile, c), lambda i: (i, 0)),   # bf16/f32, no wrapper upcast
                pl.BlockSpec((tile, 1), lambda i: (i, 0)),
            ],
            out_specs=pl.BlockSpec((tile, 1), lambda i: (i, 0)),
        ),
        compiler_params=pltpu.CompilerParams(
            dimension_semantics=("parallel",),
            vmem_limit_bytes=_VMEM_LIMIT,
        ),
    )(inputs, tgt2d)

    return out[:n, 0]


def _reference(inputs, targets, gamma=1.0):
    indexed = inputs[jnp.arange(targets.shape[0]), targets]
    probs = jnp.exp(indexed)
    return -((1.0 - probs) ** gamma) * indexed


if __name__ == "__main__":
    key = jax.random.PRNGKey(0)
    k1, k2, k3, k4 = jax.random.split(key, 4)

    # --- test 1: module-default gamma=1, f32, small shape (N = 4*8 = 32, C = 16)
    batch, seq, num_classes = 4, 8, 16
    logits = jax.random.normal(k1, (batch, seq, num_classes), dtype=jnp.float32)
    logprobs = jax.nn.log_softmax(logits, axis=-1).reshape(-1, num_classes)
    targets = jax.random.randint(k2, (batch * seq,), 0, num_classes, dtype=jnp.int32)

    loss = jax.block_until_ready(focal_loss(logprobs, targets, gamma=1.0))
    ref = _reference(logprobs, targets, 1.0)
    assert loss.shape == (batch * seq,)
    assert jnp.allclose(loss, ref, atol=1e-5, rtol=1e-5), (loss, ref)

    # --- test 2: bf16 ingestion (no wrapper upcast) + gamma=2 fast path
    lp_bf16 = logprobs.astype(jnp.bfloat16)
    loss_b = jax.block_until_ready(focal_loss(lp_bf16, targets, gamma=2.0))
    ref_b = _reference(lp_bf16.astype(jnp.float32), targets, 2.0)
    assert jnp.allclose(loss_b, ref_b, atol=1e-5, rtol=1e-5), (loss_b, ref_b)

    # --- test 3: non-multiple N (padding + multi-tile grid) + fractional gamma path
    n3 = 1000
    logits3 = jax.random.normal(k3, (n3, num_classes), dtype=jnp.float32)
    logprobs3 = jax.nn.log_softmax(logits3, axis=-1)
    targets3 = jax.random.randint(k4, (n3,), 0, num_classes, dtype=jnp.int32)
    loss3 = jax.block_until_ready(focal_loss(logprobs3, targets3, gamma=0.5))
    ref3 = _reference(logprobs3, targets3, 0.5)
    assert loss3.shape == (n3,)
    assert jnp.allclose(loss3, ref3, atol=1e-4, rtol=1e-4), (loss3, ref3)

    print("KERNEL_OK")
</pallas_src>

<mosaic_0001>
module attributes {stable_mosaic.version = 11 : i64} {
  func.func @_focal_kernel(%arg0: i32, %arg1: memref<16x16xf32, #tpu.memory_space<vmem>>, %arg2: memref<16x1xi32, #tpu.memory_space<vmem>>, %arg3: memref<16x1xf32, #tpu.memory_space<vmem>>) attributes {dimension_semantics = [#tpu.dimension_semantics<parallel>], iteration_bounds = array<i64: 2>, scalar_prefetch = 0 : i64, scratch_operands = 0 : i64, tpu.core_type = #tpu.core_type<tc>, window_params = [{transform_indices = @transform_0, window_bounds = array<i64: 16, 16>}, {transform_indices = @transform_1, window_bounds = array<i64: 16, 1>}, {transform_indices = @transform_2, window_bounds = array<i64: 16, 1>}]} {
    %c0 = arith.constant 0 : index
    %c0_0 = arith.constant 0 : index
    %0 = vector.load %arg1[%c0, %c0_0] : memref<16x16xf32, #tpu.memory_space<vmem>>, vector<16x16xf32>
    %c0_1 = arith.constant 0 : index
    %c0_2 = arith.constant 0 : index
    %1 = vector.load %arg2[%c0_1, %c0_2] : memref<16x1xi32, #tpu.memory_space<vmem>>, vector<16x1xi32>
    %2 = tpu.iota {dimensions = array<i32: 1>} : vector<16x16xi32>
    %3 = vector.broadcast %1 : vector<16x1xi32> to vector<16x16xi32>
    %4 = arith.cmpi eq, %2, %3 : vector<16x16xi32>
    %cst = arith.constant 0.000000e+00 : f32
    %5 = vector.broadcast %cst : f32 to vector<16x16xf32>
    %6 = arith.select %4, %0, %5 : vector<16x16xi1>, vector<16x16xf32>
    %cst_3 = arith.constant dense<0.000000e+00> : vector<16xf32>
    %7 = vector.multi_reduction <add>, %6, %cst_3 [1] : vector<16x16xf32> to vector<16xf32>
    %8 = vector.shape_cast %7 : vector<16xf32> to vector<16x1xf32>
    %9 = math.exp %8 : vector<16x1xf32>
    %cst_4 = arith.constant 1.000000e+00 : f32
    %10 = vector.broadcast %cst_4 : f32 to vector<16x1xf32>
    %11 = arith.subf %10, %9 : vector<16x1xf32>
    %cst_5 = arith.constant 0.000000e+00 : f32
    %12 = vector.broadcast %cst_5 : f32 to vector<16x1xf32>
    %13 = arith.subf %12, %11 : vector<16x1xf32>
    %14 = arith.mulf %13, %8 : vector<16x1xf32>
    %c0_6 = arith.constant 0 : index
    %c0_7 = arith.constant 0 : index
    %15 = vector.load %arg3[%c0_6, %c0_7] : memref<16x1xf32, #tpu.memory_space<vmem>>, vector<16x1xf32>
    tpu.vector_store %arg3[%c0_6, %c0_7], %14 {strides = array<i32>} : memref<16x1xf32, #tpu.memory_space<vmem>>, vector<16x1xf32>,
    return
  }
  func.func @transform_0(%arg0: i32) -> (i32, i32) {
    %c0_i32 = arith.constant 0 : i32
    %c0_i32_0 = arith.constant 0 : i32
    return %arg0, %c0_i32 : i32, i32
  }
  func.func @transform_1(%arg0: i32) -> (i32, i32) {
    %c0_i32 = arith.constant 0 : i32
    %c0_i32_0 = arith.constant 0 : i32
    return %arg0, %c0_i32 : i32, i32
  }
  func.func @transform_2(%arg0: i32) -> (i32, i32) {
    %c0_i32 = arith.constant 0 : i32
    %c0_i32_0 = arith.constant 0 : i32
    return %arg0, %c0_i32 : i32, i32
  }
}

</mosaic_0001>

<llo_original>
// kernel: tpu_custom_call.1
$region0: #{tpu_custom_call.1}
  #allocation0 [shape = 'u32[]', space=smem, size = 0x4, offset = 0x4, fixed_abs, tag = 'smem constant byte address 0x4 - core index']
  #allocation1 [shape = 'u32[144,128]{1,0:T(1,128)}', space=vmem, size = 0x12000, scoped, tag = 'internal scratch']
  %s0 = inlined_call_operand.vmem [shape: f32[32,16], index: 0, kind: input, shape index: {}]
  %s1 = inlined_call_operand.vmem [shape: s32[32,1], index: 1, kind: input, shape index: {}]
  %s2 = inlined_call_operand.vmem [shape: f32[32,1], index: 2, kind: output, shape index: {}]
  %s3 = sld [smem:[#allocation0]]
  $region41: #{tpu_custom_call.1} parent=0
    _
  %s5 = ssub.s32 1, %s3
  %s6 = scalar_select 0, %s5, %s3
  loop: start=0, step=1, limit=4
  $region2: #{tpu_custom_call.1} parent=0 // loop_pre_header
    _
  $region3: #{tpu_custom_call.1} parent=0 // loop_header
    %s8 = sphi 0, %s12
    %p9 = scmp.ge.s32.totalorder %s8, 4
    %s18 = sphi 0, %s20
    %s21 = sphi 0, %s18
    %s22 = sphi 0, %s21
    %s38 = sphi 0, %s22
    %s44 = sphi 0, %s46
    %s47 = sphi 0, %s44
    %s48 = sphi 0, %s47
    %s64 = sphi 0, %s48
    %s70 = sphi 0, %s72
    %s73 = sphi 0, %s70
    %s74 = sphi 0, %s73
    %s90 = sphi 0, %s74
  $region4: #{tpu_custom_call.1} parent=0 // loop_header_branch
    %11 = sbr.rel (%p9) target = $region8
  $region5: #{tpu_custom_call.1} parent=0 // loop_body
    %s13 = ssub.s32 %s8, 1
    %s14 = ssub.s32 %s8, 2
    %s15 = sadd.s32 %s8, 1
    %s16 = ssub.s32 %s8, %s15
    %p17 = scmp.eq.s32.totalorder %s16, 0
    %s19 = sadd.s32 %s18, 1
    %s20 = scalar_select %p17, %s18, %s19
    %p23 = pneg %p17
    %p24 = scmp.eq.s32.totalorder %s8, 1
    %p25 = por %p23, %p24
    %p26 = scmp.ne.s32.totalorder %s18, %s21
    %p27 = scmp.eq.s32.totalorder %s8, 0
    %p28 = por %p26, %p27
    %p29 = scmp.ne.s32.totalorder %s18, %s21
    %p30 = scmp.eq.s32.totalorder %s13, 1
    %p31 = por %p29, %p30
    %p32 = scmp.ne.s32.totalorder %s21, %s22
    %p33 = scmp.eq.s32.totalorder %s13, 0
    %p34 = por %p32, %p33
    %p35 = scmp.ne.s32.totalorder %s21, %s22
    %p36 = scmp.eq.s32.totalorder %s14, 1
    %p37 = por %p35, %p36
    %p39 = scmp.ne.s32.totalorder %s22, %s38
    %p40 = scmp.eq.s32.totalorder %s14, 0
    %p41 = por %p39, %p40
    %s42 = ssub.s32 %s8, %s15
    %p43 = scmp.eq.s32.totalorder %s42, 0
    %s45 = sadd.s32 %s44, 1
    %s46 = scalar_select %p43, %s44, %s45
    %p49 = pneg %p43
    %p50 = scmp.eq.s32.totalorder %s8, 1
    %p51 = por %p49, %p50
    %p52 = scmp.ne.s32.totalorder %s44, %s47
    %p53 = scmp.eq.s32.totalorder %s8, 0
    %p54 = por %p52, %p53
    %p55 = scmp.ne.s32.totalorder %s44, %s47
    %p56 = scmp.eq.s32.totalorder %s13, 1
    %p57 = por %p55, %p56
    %p58 = scmp.ne.s32.totalorder %s47, %s48
    %p59 = scmp.eq.s32.totalorder %s13, 0
    %p60 = por %p58, %p59
    %p61 = scmp.ne.s32.totalorder %s47, %s48
    %p62 = scmp.eq.s32.totalorder %s14, 1
    %p63 = por %p61, %p62
    %p65 = scmp.ne.s32.totalorder %s48, %s64
    %p66 = scmp.eq.s32.totalorder %s14, 0
    %p67 = por %p65, %p66
    %s68 = ssub.s32 %s8, %s15
    %p69 = scmp.eq.s32.totalorder %s68, 0
    %s71 = sadd.s32 %s70, 1
    %s72 = scalar_select %p69, %s70, %s71
    %p75 = pneg %p69
    %p76 = scmp.eq.s32.totalorder %s8, 1
    %p77 = por %p75, %p76
    %p78 = scmp.ne.s32.totalorder %s70, %s73
    %p79 = scmp.eq.s32.totalorder %s8, 0
    %p80 = por %p78, %p79
    %p81 = scmp.ne.s32.totalorder %s70, %s73
    %p82 = scmp.eq.s32.totalorder %s13, 1
    %p83 = por %p81, %p82
    %p84 = scmp.ne.s32.totalorder %s73, %s74
    %p85 = scmp.eq.s32.totalorder %s13, 0
    %p86 = por %p84, %p85
    %p87 = scmp.ne.s32.totalorder %s73, %s74
    %p88 = scmp.eq.s32.totalorder %s14, 1
    %p89 = por %p87, %p88
    %p91 = scmp.ne.s32.totalorder %s74, %s90
    %p92 = scmp.eq.s32.totalorder %s14, 0
    %p93 = por %p91, %p92
    %p94 = scmp.le.s32.totalorder 1, %s8
    %p95 = scmp.lt.s32.totalorder %s8, 3
    %p96 = pnand %p94, %p95
    %p97 = pneg %p96
    // Predicated region
    $region9: #{tpu_custom_call.1} parent=5 // pred_check
      _
    $region10: #{tpu_custom_call.1} parent=5 // pred_check_branch
      %99 = sbr.rel (%p96) target = $region12
    $region11: #{tpu_custom_call.1} parent=5 // pred_region
      %s100 = ssub.s32 %s8, 1
    $region12: #{tpu_custom_call.1} parent=5 // pred_fallthru
      _
    %p101 = scmp.lt.s32.totalorder %s8, 2
    // Predicated region
    $region13: #{tpu_custom_call.1} parent=5 // pred_check
      %p102 = pneg %p101
    $region14: #{tpu_custom_call.1} parent=5 // pred_check_branch
      %104 = sbr.rel (%p102) target = $region16
    $region15: #{tpu_custom_call.1} parent=5 // pred_region
      // Predicated region
      $region17: #{tpu_custom_call.1} parent=15 // pred_check
        %p105 = pneg %p28
      $region18: #{tpu_custom_call.1} parent=15 // pred_check_branch
        %107 = sbr.rel (%p105) target = $region20
      $region19: #{tpu_custom_call.1} parent=15 // pred_region
        %s108 = smul.u32 2, %s8
        %p109 = scmp.lt.s32.totalorder %s108, 3
        %s110 = scalar_select %p109, %s108, 3
        %s111 = smul.addr %s110, 8
        %s112 = scalar_lea.vmem %s0, %s111
        %s113 = smul.u32 2, %s8
      $region20: #{tpu_custom_call.1} parent=15 // pred_fallthru
        _
      // Predicated region
      $region21: #{tpu_custom_call.1} parent=15 // pred_check
        %p114 = pneg %p54
      $region22: #{tpu_custom_call.1} parent=15 // pred_check_branch
        %116 = sbr.rel (%p114) target = $region24
      $region23: #{tpu_custom_call.1} parent=15 // pred_region
        %s117 = smul.u32 2, %s8
        %p118 = scmp.lt.s32.totalorder %s117, 3
        %s119 = scalar_select %p118, %s117, 3
        %s120 = smul.addr %s119, 8
        %s121 = scalar_lea.vmem %s1, %s120
        %s122 = smul.u32 2, %s8
      $region24: #{tpu_custom_call.1} parent=15 // pred_fallthru
        _
    $region16: #{tpu_custom_call.1} parent=5 // pred_fallthru
      _
    %p123 = scmp.le.s32.totalorder 1, %s8
    %p124 = scmp.lt.s32.totalorder %s8, 3
    %p125 = pnand %p123, %p124
    %p126 = pneg %p125
    // Predicated region
    $region25: #{tpu_custom_call.1} parent=5 // pred_check
      _
    $region26: #{tpu_custom_call.1} parent=5 // pred_check_branch
      %128 = sbr.rel (%p125) target = $region28
    $region27: #{tpu_custom_call.1} parent=5 // pred_region
      %s129 = ssub.s32 %s8, 1
      %s130 = smul.u32 2, %s13
      %p131 = scmp.lt.s32.totalorder %s130, 3
      %s132 = scalar_select %p131, %s130, 3
      %s133 = smul.addr %s132, 8
      %s134 = scalar_lea.vmem %s0, %s133
      %p135 = pneg %p34
      %p136 = pneg %p31
      %s137 = smul.u32 2, %s13
      %p138 = scmp.lt.s32.totalorder %s137, 3
      %s139 = scalar_select %p138, %s137, 3
      %s140 = smul.addr %s139, 8
      %s141 = scalar_lea.vmem %s1, %s140
      %p142 = pneg %p60
      %p143 = pneg %p57
      %p144 = pneg %p86
      %p145 = pneg %p83
      %s146 = smul.u32 2, %s13
      %p147 = scmp.lt.s32.totalorder %s146, 3
      %s148 = scalar_select %p147, %s146, 3
      %s149 = smul.addr %s148, 8
      %s150 = scalar_lea.vmem %s2, %s149
      %s151 = smul.u32 2, %s13
      %p152 = scmp.lt.s32.totalorder %s151, 3
      %s153 = scalar_select %p152, %s151, 3
      %s154 = smul.addr %s153, 8
      %s155 = scalar_lea.vmem %s0, %s154
      %s156 = smul.u32 2, %s13
      %s157 = smul.u32 2, %s13
      %p158 = scmp.lt.s32.totalorder %s157, 3
      %s159 = scalar_select %p158, %s157, 3
      %s160 = smul.addr %s159, 8
      %s161 = scalar_lea.vmem %s1, %s160
      %s162 = smul.u32 2, %s13
      %s163 = smul.u32 2, %s13
      %p164 = scmp.lt.s32.totalorder %s163, 3
      %s165 = scalar_select %p164, %s163, 3
      %s166 = smul.addr %s165, 8
      %s167 = scalar_lea.vmem %s2, %s166
      %s168 = smul.u32 2, %s13
      %v169 = vld [vmem:[%s155] sm:$0xff]
      %v170 = vld [vmem:[%s155 + $0x8] sm:$0xff]
      %v171 = vld [vmem:[%s161] sm:$0xff]
      %v172 = vld [vmem:[%s161 + $0x8] sm:$0xff]
      %v173 = vlaneseq
      %v174 = vand.u32 %v173, 127
      %175 = vset.pattern.permute.xlu0 0
      %176 = vperm.xlu0 %175, %v171
      %v177 = vpop.permute.xlu0 %176
      %178 = vset.pattern.permute.xlu0 0
      %179 = vperm.xlu0 %178, %v172
      %v180 = vpop.permute.xlu0 %179
      %vm181 = vcmp.eq.s32.totalorder %v174, %v177
      %vm182 = vcmp.eq.s32.totalorder %v174, %v180
      %v183 = vsel %vm181, %v169, 0.0
      %v184 = vsel %vm182, %v170, 0.0
      %vm185 = vcmask 130048
      %v186 = vsel %vm185, %v183, 0.0
      %187 = vadd.xlane.f32.xlu0 %v186
      %v188 = vpop.xlane.xlu0 %187
      %v189 = vsel %vm185, %v184, 0.0
      %190 = vadd.xlane.f32.xlu0 %v189
      %v191 = vpop.xlane.xlu0 %190
      %v192 = vmul.f32 %v188, 1.442695
      %v193 = vpow.pop %v192
      %v194 = vmul.f32 %v191, 1.442695
      %v195 = vpow.pop %v194
      %v196 = vsub.f32 1.0, %v193
      %v197 = vsub.f32 1.0, %v195
      %v198 = vsub.f32 0.0, %v196
      %v199 = vsub.f32 0.0, %v197
      %v200 = vmul.f32 %v198, %v188
      %v201 = vmul.f32 %v199, %v191
      %vm202 = vcmask 7168
      %203 = vst.msk [vmem:[%s167] sm:$0xff] %vm202, %v200
      %204 = vst.msk [vmem:[%s167 + $0x8] sm:$0xff] %vm202, %v201
      %s205 = smul.u32 2, %s13
      %p206 = scmp.lt.s32.totalorder %s205, 3
      %s207 = scalar_select %p206, %s205, 3
      %s208 = smul.addr %s207, 8
      %s209 = scalar_lea.vmem %s2, %s208
      // Predicated region
      $region29: #{tpu_custom_call.1} parent=27 // pred_check
        %p210 = pneg %p83
      $region30: #{tpu_custom_call.1} parent=27 // pred_check_branch
        %212 = sbr.rel (%p210) target = $region32
      $region31: #{tpu_custom_call.1} parent=27 // pred_region
        %s213 = smul.u32 2, %s13
      $region32: #{tpu_custom_call.1} parent=27 // pred_fallthru
        _
    $region28: #{tpu_custom_call.1} parent=5 // pred_fallthru
      _
    %p214 = scmp.le.s32.totalorder 2, %s8
    // Predicated region
    $region33: #{tpu_custom_call.1} parent=5 // pred_check
      %p215 = pneg %p214
    $region34: #{tpu_custom_call.1} parent=5 // pred_check_branch
      %217 = sbr.rel (%p215) target = $region36
    $region35: #{tpu_custom_call.1} parent=5 // pred_region
      %s218 = ssub.s32 %s8, 2
      // Predicated region
      $region37: #{tpu_custom_call.1} parent=35 // pred_check
        %p219 = pneg %p89
      $region38: #{tpu_custom_call.1} parent=35 // pred_check_branch
        %221 = sbr.rel (%p219) target = $region40
      $region39: #{tpu_custom_call.1} parent=35 // pred_region
        %s222 = smul.u32 2, %s14
        %p223 = scmp.lt.s32.totalorder %s222, 3
        %s224 = scalar_select %p223, %s222, 3
        %s225 = smul.addr %s224, 8
        %s226 = scalar_lea.vmem %s2, %s225
      $region40: #{tpu_custom_call.1} parent=35 // pred_fallthru
        _
    $region36: #{tpu_custom_call.1} parent=5 // pred_fallthru
      _
  $region6: #{tpu_custom_call.1} parent=0 // loop_footer
    %s12 = sadd.s32 1, %s8
  $region7: #{tpu_custom_call.1} parent=0 // loop_footer_branch
    %7 = sbr.rel target = $region3
  $region8: #{tpu_custom_call.1} parent=0 // loop_exit
    _

</llo_original>
